<compile_context>
chip_gen: v7x
topology: tpu7x:2x2x1
jax: 0.10.0
libtpu: 0.0.40
codegen_flags: <defaults>
</compile_context>

<pallas_src>
import functools

import jax
import jax.numpy as jnp
from jax import lax
from jax.experimental import pallas as pl
from jax.experimental.pallas import tpu as pltpu


def _vmem_limit_bytes() -> int:
    """Generation-aware scoped-VMEM budget (v5e/v6e: 128 MiB, v7x: 64 MiB/TC)."""
    try:
        cap = int(pltpu.get_tpu_info().vmem_capacity_bytes)
    except Exception:
        cap = 64 * 1024 * 1024  # conservative fallback (v7x per-TC physical)
    return int(min(max(cap - 16 * 1024 * 1024, 32 * 1024 * 1024), 112 * 1024 * 1024))


def _make_contrastive_loss_kernel(tb, batch, d_pad, inv_temp, compute_dtype, in_dtype):
    # torch.nn.functional.normalize: v / max(||v||, 1e-12) == v * rsqrt(max(||v||^2, 1e-24))
    eps_sq = 1e-24
    f32 = jnp.float32

    def kernel(img_hbm, txt_hbm, out_ref, img_n_ref, txt_n_ref):
        c = pl.program_id(0)   # core-split axis ("parallel")
        j = pl.program_id(1)   # row-block axis ("arbitrary" reduction)

        # ---- first step per core: DMA inputs HBM->VMEM once, normalize into
        #      persistent scratch, zero this core's resident output block.
        @pl.when(j == 0)
        def _init():
            def _load_normalize(stage_img, stage_txt, sems):
                cp_i = pltpu.make_async_copy(img_hbm, stage_img, sems.at[0])
                cp_t = pltpu.make_async_copy(txt_hbm, stage_txt, sems.at[1])
                cp_i.start()
                cp_t.start()
                cp_i.wait()
                x = stage_img[...].astype(f32)
                inv_norm = lax.rsqrt(
                    jnp.maximum(jnp.sum(x * x, axis=1, keepdims=True), eps_sq))
                # Fold 1/temperature into the image operand ONLY.
                img_n_ref[...] = (x * (inv_norm * inv_temp)).astype(compute_dtype)
                cp_t.wait()
                x = stage_txt[...].astype(f32)
                inv_norm = lax.rsqrt(
                    jnp.maximum(jnp.sum(x * x, axis=1, keepdims=True), eps_sq))
                txt_n_ref[...] = (x * inv_norm).astype(compute_dtype)

            pl.run_scoped(
                _load_normalize,
                pltpu.VMEM((batch, d_pad), in_dtype),
                pltpu.VMEM((batch, d_pad), in_dtype),
                pltpu.SemaphoreType.DMA((2,)),
            )
            out_ref[...] = jnp.zeros_like(out_ref)

        # ---- this core's current row block of normalized embeddings.
        r0 = pl.multiple_of((c * pl.num_programs(1) + j) * tb, tb)
        img_bn = img_n_ref[pl.ds(r0, tb), :]   # (tb, Dp), 1/T already folded in
        txt_bn = txt_n_ref[pl.ds(r0, tb), :]   # (tb, Dp)

        # Correct-pair (diagonal) logits via a lane-axis row dot (shared term).
        diag = jnp.sum(img_bn.astype(f32) * txt_bn.astype(f32), axis=1, keepdims=True)

        # Contract the feature dim of both operands (no materialized transpose);
        # bf16 operands on the MXU, f32 accumulation.
        # TODO(synk): if the bundle dump shows a per-step vxpose for the NT-form
        # RHS, keep a (Dp, B) transposed copy of the scratch instead.
        dn = (((1,), (1,)), ((), ()))
        logits_i = lax.dot_general(img_bn, txt_n_ref[...], dn,
                                   preferred_element_type=f32)   # (tb, B) img->txt
        logits_t = lax.dot_general(txt_bn, img_n_ref[...], dn,
                                   preferred_element_type=f32)   # (tb, B) txt->img

        # Lane-axis, max-stabilized logsumexp for both strips.
        m_i = jnp.max(logits_i, axis=1, keepdims=True)
        lse_i = m_i + jnp.log(jnp.sum(jnp.exp(logits_i - m_i), axis=1, keepdims=True))
        m_t = jnp.max(logits_t, axis=1, keepdims=True)
        lse_t = m_t + jnp.log(jnp.sum(jnp.exp(logits_t - m_t), axis=1, keepdims=True))

        # Single combined cross-sublane reduction; accumulate into the resident
        # (1,1,1) output block (zeroed at j==0, scaled at j==last).
        out_ref[...] = out_ref[...] + jnp.sum(lse_i + lse_t - 2.0 * diag)

        @pl.when(j == pl.num_programs(1) - 1)
        def _finalize():
            out_ref[...] = out_ref[...] * (0.5 / batch)

    return kernel


@functools.partial(jax.jit, static_argnames=("temperature", "block_rows", "compute_dtype"))
def contrastive_loss(image_embeds: jax.Array, text_embeds: jax.Array,
                     temperature: float = 0.05, block_rows: int | None = None,
                     compute_dtype=jnp.bfloat16) -> jax.Array:
    """Scalar f32 loss matching ContrastiveLoss.forward semantics."""
    B, D = image_embeds.shape
    assert text_embeds.shape == (B, D)
    assert image_embeds.dtype == text_embeds.dtype
    in_dtype = image_embeds.dtype

    # Zero-pad the feature dim to a lane multiple: padding changes neither the
    # row norms nor any dot product, so semantics are preserved exactly.
    d_pad = ((D + 127) // 128) * 128
    if d_pad != D:
        pad = ((0, 0), (0, d_pad - D))
        image_embeds = jnp.pad(image_embeds, pad)
        text_embeds = jnp.pad(text_embeds, pad)

    vmem_limit = _vmem_limit_bytes()
    compute_bytes = jnp.dtype(compute_dtype).itemsize
    in_bytes = jnp.dtype(in_dtype).itemsize
    # Whole-kernel-lifetime scratch + transient init staging.
    resident = 2 * B * d_pad * compute_bytes + 2 * B * d_pad * in_bytes

    if block_rows is None:
        budget = max(vmem_limit - resident, 2 * 1024 * 1024)
        for cand in (512, 256, 128, 64, 32, 16, 8):
            # ~4 f32 (tb, B) strip temporaries of headroom per grid step.
            if B % cand == 0 and cand * B * 16 <= budget:
                block_rows = cand
                break
        else:
            block_rows = B   # tiny / irregular batch: single full block
    tb = block_rows
    assert B % tb == 0, "block_rows must divide the batch size"
    assert tb == B or tb % 8 == 0, "block_rows must be a multiple of 8 (sublane)"

    blocks = B // tb
    ncores = 2 if (blocks % 2 == 0 and blocks >= 2) else 1   # v7x TensorCore split
    blocks_per_core = blocks // ncores

    kernel = _make_contrastive_loss_kernel(tb, B, d_pad, 1.0 / float(temperature),
                                           compute_dtype, in_dtype)

    out = pl.pallas_call(
        kernel,
        out_shape=jax.ShapeDtypeStruct((ncores, 1, 1), jnp.float32),
        grid_spec=pltpu.PrefetchScalarGridSpec(
            num_scalar_prefetch=0,
            grid=(ncores, blocks_per_core),
            in_specs=[
                pl.BlockSpec(memory_space=pl.ANY),   # image embeds stay in HBM
                pl.BlockSpec(memory_space=pl.ANY),   # text embeds stay in HBM
            ],
            out_specs=pl.BlockSpec((1, 1, 1), lambda c, j: (c, 0, 0)),
            scratch_shapes=[
                pltpu.VMEM((B, d_pad), compute_dtype),  # normalized img (* 1/T)
                pltpu.VMEM((B, d_pad), compute_dtype),  # normalized txt
            ],
        ),
        compiler_params=pltpu.CompilerParams(
            dimension_semantics=("parallel", "arbitrary"),
            vmem_limit_bytes=vmem_limit,
        ),
    )(image_embeds, text_embeds)
    # Each core's slot already carries its rows' contribution * 0.5/B.
    return jnp.sum(out)


def _reference_loss(image_embeds, text_embeds, temperature=0.05):
    """Plain-JAX reference (mirrors the PyTorch module)."""
    eps = 1e-12
    img = image_embeds.astype(jnp.float32)
    txt = text_embeds.astype(jnp.float32)
    img = img / jnp.maximum(jnp.linalg.norm(img, axis=1, keepdims=True), eps)
    txt = txt / jnp.maximum(jnp.linalg.norm(txt, axis=1, keepdims=True), eps)
    logits = img @ txt.T / temperature
    labels = jnp.arange(img.shape[0])

    def ce(lg):
        lse = jax.nn.logsumexp(lg, axis=1)
        return jnp.mean(lse - lg[jnp.arange(lg.shape[0]), labels])

    return (ce(logits) + ce(logits.T)) / 2.0


if __name__ == "__main__":
    key = jax.random.PRNGKey(0)
    k1, k2, k3, k4 = jax.random.split(key, 4)

    # Small shapes consistent with the module: batch=8, hidden=32.
    B, D = 8, 32
    image_embeds = jax.random.normal(k1, (B, D), dtype=jnp.float32)
    text_embeds = jax.random.normal(k2, (B, D), dtype=jnp.float32)
    ref = _reference_loss(image_embeds, text_embeds, temperature=0.05)

    # f32 MXU-operand path: tight tolerance against the f32 reference.
    loss_f32 = jax.block_until_ready(
        contrastive_loss(image_embeds, text_embeds, temperature=0.05,
                         compute_dtype=jnp.float32))
    assert jnp.allclose(loss_f32, ref, atol=1e-4, rtol=1e-4), (loss_f32, ref)

    # Default bf16 MXU-operand path: bf16 mantissa -> looser tolerance.
    loss_bf16 = jax.block_until_ready(
        contrastive_loss(image_embeds, text_embeds, temperature=0.05))
    assert jnp.allclose(loss_bf16, ref, atol=8e-2, rtol=8e-2), (loss_bf16, ref)

    # Multi-block accumulation + 2-way core-split path: B=16 with 8-row blocks.
    B2 = 16
    img2 = jax.random.normal(k3, (B2, D), dtype=jnp.float32)
    txt2 = jax.random.normal(k4, (B2, D), dtype=jnp.float32)
    ref2 = _reference_loss(img2, txt2, temperature=0.05)
    loss2_f32 = jax.block_until_ready(
        contrastive_loss(img2, txt2, temperature=0.05, block_rows=8,
                         compute_dtype=jnp.float32))
    assert jnp.allclose(loss2_f32, ref2, atol=1e-4, rtol=1e-4), (loss2_f32, ref2)
    loss2_bf16 = jax.block_until_ready(
        contrastive_loss(img2, txt2, temperature=0.05, block_rows=8))
    assert jnp.allclose(loss2_bf16, ref2, atol=8e-2, rtol=8e-2), (loss2_bf16, ref2)

    print("KERNEL_OK")
</pallas_src>

<mosaic_0001>
module attributes {stable_mosaic.version = 11 : i64} {
  func.func @kernel(%arg0: i32, %arg1: i32, %arg2: memref<8x128xf32, #tpu.memory_space<any>>, %arg3: memref<8x128xf32, #tpu.memory_space<any>>, %arg4: memref<1x1x1xf32, #tpu.memory_space<vmem>>, %arg5: memref<8x128xf32, #tpu.memory_space<vmem>>, %arg6: memref<8x128xf32, #tpu.memory_space<vmem>>) attributes {dimension_semantics = [#tpu.dimension_semantics<parallel>, #tpu.dimension_semantics<arbitrary>], iteration_bounds = array<i64: 1, 1>, scalar_prefetch = 0 : i64, scratch_operands = 2 : i64, tpu.core_type = #tpu.core_type<tc>, window_params = [{}, {}, {transform_indices = @transform_2, window_bounds = array<i64: 1, 1, 1>}]} {
    %c0_i32 = arith.constant 0 : i32
    %0 = arith.cmpi eq, %arg1, %c0_i32 : i32
    %1 = arith.extui %0 : i1 to i32
    %c0_i32_0 = arith.constant 0 : i32
    %2 = arith.cmpi ne, %1, %c0_i32_0 : i32
    scf.if %2 {
      "tpu.region"() ({
        %alloca = memref.alloca() : memref<8x128xf32, #tpu.memory_space<vmem>>
        %alloca_26 = memref.alloca() : memref<8x128xf32, #tpu.memory_space<vmem>>
        %53 = tpu.sem_alloc : memref<2x!tpu.dma_semaphore, #tpu.memory_space<semaphore_mem>>
        %c0_i32_27 = arith.constant 0 : i32
        %54 = tpu.memref_slice %53[%c0_i32_27] : memref<2x!tpu.dma_semaphore, #tpu.memory_space<semaphore_mem>> -> memref<1x!tpu.dma_semaphore, #tpu.memory_space<semaphore_mem>>
        %55 = tpu.memref_squeeze %54 : memref<1x!tpu.dma_semaphore, #tpu.memory_space<semaphore_mem>> -> memref<!tpu.dma_semaphore, #tpu.memory_space<semaphore_mem>>
        tpu.enqueue_dma source(%arg2 : memref<8x128xf32, #tpu.memory_space<any>>) target(%alloca : memref<8x128xf32, #tpu.memory_space<vmem>>) target_semaphore(%55 : memref<!tpu.dma_semaphore, #tpu.memory_space<semaphore_mem>>)
        %c1_i32_28 = arith.constant 1 : i32
        %56 = tpu.memref_slice %53[%c1_i32_28] : memref<2x!tpu.dma_semaphore, #tpu.memory_space<semaphore_mem>> -> memref<1x!tpu.dma_semaphore, #tpu.memory_space<semaphore_mem>>
        %57 = tpu.memref_squeeze %56 : memref<1x!tpu.dma_semaphore, #tpu.memory_space<semaphore_mem>> -> memref<!tpu.dma_semaphore, #tpu.memory_space<semaphore_mem>>
        tpu.enqueue_dma source(%arg3 : memref<8x128xf32, #tpu.memory_space<any>>) target(%alloca_26 : memref<8x128xf32, #tpu.memory_space<vmem>>) target_semaphore(%57 : memref<!tpu.dma_semaphore, #tpu.memory_space<semaphore_mem>>)
        %c0_i32_29 = arith.constant 0 : i32
        %58 = tpu.memref_slice %53[%c0_i32_29] : memref<2x!tpu.dma_semaphore, #tpu.memory_space<semaphore_mem>> -> memref<1x!tpu.dma_semaphore, #tpu.memory_space<semaphore_mem>>
        %59 = tpu.memref_squeeze %58 : memref<1x!tpu.dma_semaphore, #tpu.memory_space<semaphore_mem>> -> memref<!tpu.dma_semaphore, #tpu.memory_space<semaphore_mem>>
        tpu.wait_dma2 semaphore(%59 : memref<!tpu.dma_semaphore, #tpu.memory_space<semaphore_mem>>) src(%arg2 : memref<8x128xf32, #tpu.memory_space<any>>) dst(%alloca : memref<8x128xf32, #tpu.memory_space<vmem>>)
        %c0_30 = arith.constant 0 : index
        %c0_31 = arith.constant 0 : index
        %60 = vector.load %alloca[%c0_30, %c0_31] : memref<8x128xf32, #tpu.memory_space<vmem>>, vector<8x128xf32>
        %61 = arith.mulf %60, %60 : vector<8x128xf32>
        %cst_32 = arith.constant dense<0.000000e+00> : vector<8xf32>
        %62 = vector.multi_reduction <add>, %61, %cst_32 [1] : vector<8x128xf32> to vector<8xf32>
        %63 = vector.shape_cast %62 : vector<8xf32> to vector<8x1xf32>
        %cst_33 = arith.constant 1.000000e-24 : f32
        %64 = vector.broadcast %cst_33 : f32 to vector<8x1xf32>
        %65 = arith.maximumf %63, %64 : vector<8x1xf32>
        %66 = math.rsqrt %65 : vector<8x1xf32>
        %cst_34 = arith.constant 2.000000e+01 : f32
        %67 = vector.broadcast %cst_34 : f32 to vector<8x1xf32>
        %68 = arith.mulf %66, %67 : vector<8x1xf32>
        %69 = vector.broadcast %68 : vector<8x1xf32> to vector<8x128xf32>
        %70 = arith.mulf %60, %69 : vector<8x128xf32>
        %c0_35 = arith.constant 0 : index
        %c0_36 = arith.constant 0 : index
        %71 = vector.load %arg5[%c0_35, %c0_36] : memref<8x128xf32, #tpu.memory_space<vmem>>, vector<8x128xf32>
        tpu.vector_store %arg5[%c0_35, %c0_36], %70 {strides = array<i32>} : memref<8x128xf32, #tpu.memory_space<vmem>>, vector<8x128xf32>,
        %c1_i32_37 = arith.constant 1 : i32
        %72 = tpu.memref_slice %53[%c1_i32_37] : memref<2x!tpu.dma_semaphore, #tpu.memory_space<semaphore_mem>> -> memref<1x!tpu.dma_semaphore, #tpu.memory_space<semaphore_mem>>
        %73 = tpu.memref_squeeze %72 : memref<1x!tpu.dma_semaphore, #tpu.memory_space<semaphore_mem>> -> memref<!tpu.dma_semaphore, #tpu.memory_space<semaphore_mem>>
        tpu.wait_dma2 semaphore(%73 : memref<!tpu.dma_semaphore, #tpu.memory_space<semaphore_mem>>) src(%arg3 : memref<8x128xf32, #tpu.memory_space<any>>) dst(%alloca_26 : memref<8x128xf32, #tpu.memory_space<vmem>>)
        %c0_38 = arith.constant 0 : index
        %c0_39 = arith.constant 0 : index
        %74 = vector.load %alloca_26[%c0_38, %c0_39] : memref<8x128xf32, #tpu.memory_space<vmem>>, vector<8x128xf32>
        %75 = arith.mulf %74, %74 : vector<8x128xf32>
        %cst_40 = arith.constant dense<0.000000e+00> : vector<8xf32>
        %76 = vector.multi_reduction <add>, %75, %cst_40 [1] : vector<8x128xf32> to vector<8xf32>
        %77 = vector.shape_cast %76 : vector<8xf32> to vector<8x1xf32>
        %cst_41 = arith.constant 1.000000e-24 : f32
        %78 = vector.broadcast %cst_41 : f32 to vector<8x1xf32>
        %79 = arith.maximumf %77, %78 : vector<8x1xf32>
        %80 = math.rsqrt %79 : vector<8x1xf32>
        %81 = vector.broadcast %80 : vector<8x1xf32> to vector<8x128xf32>
        %82 = arith.mulf %74, %81 : vector<8x128xf32>
        %c0_42 = arith.constant 0 : index
        %c0_43 = arith.constant 0 : index
        %83 = vector.load %arg6[%c0_42, %c0_43] : memref<8x128xf32, #tpu.memory_space<vmem>>, vector<8x128xf32>
        tpu.vector_store %arg6[%c0_42, %c0_43], %82 {strides = array<i32>} : memref<8x128xf32, #tpu.memory_space<vmem>>, vector<8x128xf32>,
        tpu.yield
      }) : () -> ()
      %cst_22 = arith.constant 0.000000e+00 : f32
      %51 = vector.broadcast %cst_22 : f32 to vector<1x1x1xf32>
      %c0_23 = arith.constant 0 : index
      %c0_24 = arith.constant 0 : index
      %c0_25 = arith.constant 0 : index
      %52 = vector.load %arg4[%c0_23, %c0_24, %c0_25] : memref<1x1x1xf32, #tpu.memory_space<vmem>>, vector<1x1x1xf32>
      tpu.vector_store %arg4[%c0_23, %c0_24, %c0_25], %51 {strides = array<i32>} : memref<1x1x1xf32, #tpu.memory_space<vmem>>, vector<1x1x1xf32>,
    } else {
    }
    %c1_i32 = arith.constant 1 : i32
    %3 = arith.muli %arg0, %c1_i32 : i32
    %4 = arith.addi %3, %arg1 : i32
    %c8_i32 = arith.constant 8 : i32
    %5 = arith.muli %4, %c8_i32 : i32
    %6 = tpu.assume_multiple %5, 8 : i32
    %7 = arith.index_cast %6 : i32 to index
    %c0 = arith.constant 0 : index
    %8 = vector.load %arg5[%7, %c0] : memref<8x128xf32, #tpu.memory_space<vmem>>, vector<8x128xf32>
    %9 = arith.index_cast %6 : i32 to index
    %c0_1 = arith.constant 0 : index
    %10 = vector.load %arg6[%9, %c0_1] : memref<8x128xf32, #tpu.memory_space<vmem>>, vector<8x128xf32>
    %11 = arith.mulf %8, %10 : vector<8x128xf32>
    %cst = arith.constant dense<0.000000e+00> : vector<8xf32>
    %12 = vector.multi_reduction <add>, %11, %cst [1] : vector<8x128xf32> to vector<8xf32>
    %13 = vector.shape_cast %12 : vector<8xf32> to vector<8x1xf32>
    %c0_2 = arith.constant 0 : index
    %c0_3 = arith.constant 0 : index
    %14 = vector.load %arg6[%c0_2, %c0_3] : memref<8x128xf32, #tpu.memory_space<vmem>>, vector<8x128xf32>
    %cst_4 = arith.constant dense<0.000000e+00> : vector<8x8xf32>
    %15 = tpu.matmul %8, %14, %cst_4 {dimension_numbers = #tpu.dot_dimension_numbers<[1], [1], [0], [0], [0, 0, 1, 0], [], []>} : vector<8x128xf32>, vector<8x128xf32>, vector<8x8xf32> -> vector<8x8xf32>
    %c0_5 = arith.constant 0 : index
    %c0_6 = arith.constant 0 : index
    %16 = vector.load %arg5[%c0_5, %c0_6] : memref<8x128xf32, #tpu.memory_space<vmem>>, vector<8x128xf32>
    %cst_7 = arith.constant dense<0.000000e+00> : vector<8x8xf32>
    %17 = tpu.matmul %10, %16, %cst_7 {dimension_numbers = #tpu.dot_dimension_numbers<[1], [1], [0], [0], [0, 0, 1, 0], [], []>} : vector<8x128xf32>, vector<8x128xf32>, vector<8x8xf32> -> vector<8x8xf32>
    %cst_8 = arith.constant dense<0xFF800000> : vector<8xf32>
    %18 = vector.multi_reduction <maximumf>, %15, %cst_8 [1] : vector<8x8xf32> to vector<8xf32>
    %19 = vector.shape_cast %18 : vector<8xf32> to vector<8x1xf32>
    %20 = vector.broadcast %19 : vector<8x1xf32> to vector<8x8xf32>
    %21 = arith.subf %15, %20 : vector<8x8xf32>
    %22 = math.exp %21 : vector<8x8xf32>
    %cst_9 = arith.constant dense<0.000000e+00> : vector<8xf32>
    %23 = vector.multi_reduction <add>, %22, %cst_9 [1] : vector<8x8xf32> to vector<8xf32>
    %24 = vector.shape_cast %23 : vector<8xf32> to vector<8x1xf32>
    %25 = math.log %24 : vector<8x1xf32>
    %26 = arith.addf %19, %25 : vector<8x1xf32>
    %cst_10 = arith.constant dense<0xFF800000> : vector<8xf32>
    %27 = vector.multi_reduction <maximumf>, %17, %cst_10 [1] : vector<8x8xf32> to vector<8xf32>
    %28 = vector.shape_cast %27 : vector<8xf32> to vector<8x1xf32>
    %29 = vector.broadcast %28 : vector<8x1xf32> to vector<8x8xf32>
    %30 = arith.subf %17, %29 : vector<8x8xf32>
    %31 = math.exp %30 : vector<8x8xf32>
    %cst_11 = arith.constant dense<0.000000e+00> : vector<8xf32>
    %32 = vector.multi_reduction <add>, %31, %cst_11 [1] : vector<8x8xf32> to vector<8xf32>
    %33 = vector.shape_cast %32 : vector<8xf32> to vector<8x1xf32>
    %34 = math.log %33 : vector<8x1xf32>
    %35 = arith.addf %28, %34 : vector<8x1xf32>
    %c0_12 = arith.constant 0 : index
    %c0_13 = arith.constant 0 : index
    %c0_14 = arith.constant 0 : index
    %36 = vector.load %arg4[%c0_12, %c0_13, %c0_14] : memref<1x1x1xf32, #tpu.memory_space<vmem>>, vector<1x1x1xf32>
    %37 = arith.addf %26, %35 : vector<8x1xf32>
    %cst_15 = arith.constant 2.000000e+00 : f32
    %38 = vector.broadcast %cst_15 : f32 to vector<8x1xf32>
    %39 = arith.mulf %38, %13 : vector<8x1xf32>
    %40 = arith.subf %37, %39 : vector<8x1xf32>
    %41 = vector.shape_cast %40 : vector<8x1xf32> to vector<1x8x1xf32>
    %cst_16 = arith.constant dense<0.000000e+00> : vector<1xf32>
    %42 = vector.multi_reduction <add>, %41, %cst_16 [1, 2] : vector<1x8x1xf32> to vector<1xf32>
    %43 = vector.shape_cast %42 : vector<1xf32> to vector<1x1x1xf32>
    %44 = vector.extract %43[0, 0, 0] : f32 from vector<1x1x1xf32>
    %45 = vector.broadcast %44 : f32 to vector<1x1x1xf32>
    %46 = arith.addf %36, %45 : vector<1x1x1xf32>
    %c0_17 = arith.constant 0 : index
    %c0_18 = arith.constant 0 : index
    %c0_19 = arith.constant 0 : index
    %47 = vector.load %arg4[%c0_17, %c0_18, %c0_19] : memref<1x1x1xf32, #tpu.memory_space<vmem>>, vector<1x1x1xf32>
    tpu.vector_store %arg4[%c0_17, %c0_18, %c0_19], %46 {strides = array<i32>} : memref<1x1x1xf32, #tpu.memory_space<vmem>>, vector<1x1x1xf32>,
    %c0_i32_20 = arith.constant 0 : i32
    %48 = arith.cmpi eq, %arg1, %c0_i32_20 : i32
    %49 = arith.extui %48 : i1 to i32
    %c0_i32_21 = arith.constant 0 : i32
    %50 = arith.cmpi ne, %49, %c0_i32_21 : i32
    scf.if %50 {
      %c0_22 = arith.constant 0 : index
      %c0_23 = arith.constant 0 : index
      %c0_24 = arith.constant 0 : index
      %51 = vector.load %arg4[%c0_22, %c0_23, %c0_24] : memref<1x1x1xf32, #tpu.memory_space<vmem>>, vector<1x1x1xf32>
      %cst_25 = arith.constant 6.250000e-02 : f32
      %52 = vector.broadcast %cst_25 : f32 to vector<1x1x1xf32>
      %53 = arith.mulf %51, %52 : vector<1x1x1xf32>
      %c0_26 = arith.constant 0 : index
      %c0_27 = arith.constant 0 : index
      %c0_28 = arith.constant 0 : index
      %54 = vector.load %arg4[%c0_26, %c0_27, %c0_28] : memref<1x1x1xf32, #tpu.memory_space<vmem>>, vector<1x1x1xf32>
      tpu.vector_store %arg4[%c0_26, %c0_27, %c0_28], %53 {strides = array<i32>} : memref<1x1x1xf32, #tpu.memory_space<vmem>>, vector<1x1x1xf32>,
    } else {
    }
    return
  }
  func.func @transform_2(%arg0: i32, %arg1: i32) -> (i32, i32, i32) {
    %c0_i32 = arith.constant 0 : i32
    %c0_i32_0 = arith.constant 0 : i32
    %c0_i32_1 = arith.constant 0 : i32
    return %arg0, %c0_i32, %c0_i32_0 : i32, i32, i32
  }
}

</mosaic_0001>

<llo_original>
// kernel: contrastive_loss.1
$region0: #{contrastive_loss.1}
  #allocation0 [shape = 'u32[]', space=smem, size = 0x4, offset = 0x4, fixed_abs, tag = 'smem constant byte address 0x4 - core index']
  #allocation1 [shape = 'u32[144,128]{1,0:T(1,128)}', space=vmem, size = 0x12000, scoped, tag = 'internal scratch']
  #allocation2 [shape = 'f32[8,128]{1,0:T(8,128)}', space=vmem, size = 0x1000, scoped, tag = 'scratch operand']
  #allocation3 [shape = 'f32[8,128]{1,0:T(8,128)}', space=vmem, size = 0x1000, scoped, tag = 'scratch operand']
  #allocation9 [shape = 's32[]', space=sflag, size = 0x4, offset = 0, fixed_abs, tag = 'sflag constant byte address 0x0 - dummy sync flag']
  #allocation10 [shape = 's32[]', space=sflag, size = 0x4, offset = 0, fixed_abs, tag = 'sflag constant byte address 0x0 - dummy sync flag']
  %s0 = inlined_call_operand.vmem [shape: f32[8,128], index: 0, kind: input, shape index: {}]
  %s1 = inlined_call_operand.vmem [shape: f32[8,128], index: 1, kind: input, shape index: {}]
  %s2 = inlined_call_operand.hbm [shape: f32[1,1,1], index: 2, kind: output, shape index: {}]
  %s3 = sld [smem:[#allocation0]]
  $region87: #{contrastive_loss.1} parent=0
    _
  %s5 = ssub.s32 1, %s3
  %s6 = scalar_select 0, %s5, %s3
  $region1: #{contrastive_loss.1} parent=0
    #allocation4 [shape = 'u8[512]{0}', space=vmem, size = 0x400, scoped, tag = 'output window, operand 0, single buffered']
    #allocation5 [shape = 's32[1]{0}', space=sflag, size = 0x4, scoped, tag = 'scoped memory for contrastive_loss.1']
    %7 = vsyncpa [#allocation5], 0
    %p8 = scmp.eq.s32.totalorder 0, 0
    // Predicated region
    $region2: #{contrastive_loss.1} parent=1 // pred_check
      %p9 = pneg %p8
    $region3: #{contrastive_loss.1} parent=1 // pred_check_branch
      %11 = sbr.rel (%p9) target = $region5
    $region4: #{contrastive_loss.1} parent=1 // pred_region
      $region6: #{contrastive_loss.1} parent=4
        #allocation6 [shape = 'u8[4096]{0}', space=vmem, size = 0x1000, scoped, tag = 'scoped memory for contrastive_loss.1']
        #allocation7 [shape = 'u8[4096]{0}', space=vmem, size = 0x1000, scoped, tag = 'scoped memory for contrastive_loss.1']
        #allocation8 [shape = 's32[2]{0}', space=sflag, size = 0x8, scoped, tag = 'scoped memory for contrastive_loss.1']
        %p13 = scmp.lt.u32.totalorder 8, 8
        %p14 = pneg %p13
        // Predicated region
        $region7: #{contrastive_loss.1} parent=6 // pred_check
          _
        $region8: #{contrastive_loss.1} parent=6 // pred_check_branch
          %16 = sbr.rel (%p13) target = $region10
        $region9: #{contrastive_loss.1} parent=6 // pred_region
          %s31 = sand.u32 8, 7
          %p32 = scmp.eq.s32.totalorder %s31, 0
          // Predicated region
          $region22: #{contrastive_loss.1} parent=9 // pred_check
            %p33 = pneg %p32
          $region23: #{contrastive_loss.1} parent=9 // pred_check_branch
            %35 = sbr.rel (%p33) target = $region25
          $region24: #{contrastive_loss.1} parent=9 // pred_region
            loop: start=0, step=1, limit=1
            $region26: #{contrastive_loss.1} parent=24 // loop_pre_header
              _
            $region27: #{contrastive_loss.1} parent=24 // loop_header
              %s37 = sphi 0, %s41
              %p38 = scmp.ge.s32.totalorder %s37, 1
              %s42 = sphi %s0, %s0
              %s43 = sphi [#allocation6], [#allocation6]
            $region28: #{contrastive_loss.1} parent=24 // loop_header_branch
              %40 = sbr.rel (%p38) target = $region32
            $region29: #{contrastive_loss.1} parent=24 // loop_body
              %v44 = vld [vmem:[%s42] sm:$0xff]
              %45 = vst [vmem:[%s43] sm:$0xff] %v44
            $region30: #{contrastive_loss.1} parent=24 // loop_footer
              %s41 = sadd.s32 1, %s37
            $region31: #{contrastive_loss.1} parent=24 // loop_footer_branch
              %36 = sbr.rel target = $region27
            $region32: #{contrastive_loss.1} parent=24 // loop_exit
              _
          $region25: #{contrastive_loss.1} parent=9 // pred_fallthru
            _
          %p46 = pneg %p32
          // Predicated region
          $region33: #{contrastive_loss.1} parent=9 // pred_check
            _
          $region34: #{contrastive_loss.1} parent=9 // pred_check_branch
            %48 = sbr.rel (%p32) target = $region36
          $region35: #{contrastive_loss.1} parent=9 // pred_region
            %s49 = sand.u32 8, 7
          $region36: #{contrastive_loss.1} parent=9 // pred_fallthru
            _
        $region10: #{contrastive_loss.1} parent=6 // pred_fallthru
          _
        // Predicated region
        $region11: #{contrastive_loss.1} parent=6 // pred_check
          %p17 = pneg %p13
        $region12: #{contrastive_loss.1} parent=6 // pred_check_branch
          %19 = sbr.rel (%p17) target = $region14
        $region13: #{contrastive_loss.1} parent=6 // pred_region
          %s20 = sshllo.u32 0, 8
          loop: start=0, step=1, limit=1
          $region15: #{contrastive_loss.1} parent=13 // loop_pre_header
            _
          $region16: #{contrastive_loss.1} parent=13 // loop_header
            %s22 = sphi 0, %s26
            %p23 = scmp.ge.s32.totalorder %s22, 1
            %s27 = sphi %s0, %s0
            %s28 = sphi [#allocation6], [#allocation6]
          $region17: #{contrastive_loss.1} parent=13 // loop_header_branch
            %25 = sbr.rel (%p23) target = $region21
          $region18: #{contrastive_loss.1} parent=13 // loop_body
            %v29 = vld [vmem:[%s27] sm:%s20]
            %30 = vst [vmem:[%s28] sm:%s20] %v29
          $region19: #{contrastive_loss.1} parent=13 // loop_footer
            %s26 = sadd.s32 1, %s22
          $region20: #{contrastive_loss.1} parent=13 // loop_footer_branch
            %21 = sbr.rel target = $region16
          $region21: #{contrastive_loss.1} parent=13 // loop_exit
            _
        $region14: #{contrastive_loss.1} parent=6 // pred_fallthru
          _
        // Predicated region
        $region37: #{contrastive_loss.1} parent=6 // pred_check
          _
        $region38: #{contrastive_loss.1} parent=6 // pred_check_branch
          %52 = sbr.rel (0) target = $region40
        $region39: #{contrastive_loss.1} parent=6 // pred_region
          %53 = vsyncadd [#allocation8], 128
        $region40: #{contrastive_loss.1} parent=6 // pred_fallthru
          _
        %s54 = scalar_lea.sflag [#allocation8], 1
        %p56 = scmp.lt.u32.totalorder 8, 8
        %p57 = pneg %p56
        // Predicated region
        $region41: #{contrastive_loss.1} parent=6 // pred_check
          _
        $region42: #{contrastive_loss.1} parent=6 // pred_check_branch
          %59 = sbr.rel (%p56) target = $region44
        $region43: #{contrastive_loss.1} parent=6 // pred_region
          %s74 = sand.u32 8, 7
          %p75 = scmp.eq.s32.totalorder %s74, 0
          // Predicated region
          $region56: #{contrastive_loss.1} parent=43 // pred_check
            %p76 = pneg %p75
          $region57: #{contrastive_loss.1} parent=43 // pred_check_branch
            %78 = sbr.rel (%p76) target = $region59
          $region58: #{contrastive_loss.1} parent=43 // pred_region
            loop: start=0, step=1, limit=1
            $region60: #{contrastive_loss.1} parent=58 // loop_pre_header
              _
            $region61: #{contrastive_loss.1} parent=58 // loop_header
              %s80 = sphi 0, %s84
              %p81 = scmp.ge.s32.totalorder %s80, 1
              %s85 = sphi %s1, %s1
              %s86 = sphi [#allocation7], [#allocation7]
            $region62: #{contrastive_loss.1} parent=58 // loop_header_branch
              %83 = sbr.rel (%p81) target = $region66
            $region63: #{contrastive_loss.1} parent=58 // loop_body
              %v87 = vld [vmem:[%s85] sm:$0xff]
              %88 = vst [vmem:[%s86] sm:$0xff] %v87
            $region64: #{contrastive_loss.1} parent=58 // loop_footer
              %s84 = sadd.s32 1, %s80
            $region65: #{contrastive_loss.1} parent=58 // loop_footer_branch
              %79 = sbr.rel target = $region61
            $region66: #{contrastive_loss.1} parent=58 // loop_exit
              _
          $region59: #{contrastive_loss.1} parent=43 // pred_fallthru
            _
          %p89 = pneg %p75
          // Predicated region
          $region67: #{contrastive_loss.1} parent=43 // pred_check
            _
          $region68: #{contrastive_loss.1} parent=43 // pred_check_branch
            %91 = sbr.rel (%p75) target = $region70
          $region69: #{contrastive_loss.1} parent=43 // pred_region
            %s92 = sand.u32 8, 7
          $region70: #{contrastive_loss.1} parent=43 // pred_fallthru
            _
        $region44: #{contrastive_loss.1} parent=6 // pred_fallthru
          _
        // Predicated region
        $region45: #{contrastive_loss.1} parent=6 // pred_check
          %p60 = pneg %p56
        $region46: #{contrastive_loss.1} parent=6 // pred_check_branch
          %62 = sbr.rel (%p60) target = $region48
        $region47: #{contrastive_loss.1} parent=6 // pred_region
          %s63 = sshllo.u32 0, 8
          loop: start=0, step=1, limit=1
          $region49: #{contrastive_loss.1} parent=47 // loop_pre_header
            _
          $region50: #{contrastive_loss.1} parent=47 // loop_header
            %s65 = sphi 0, %s69
            %p66 = scmp.ge.s32.totalorder %s65, 1
            %s70 = sphi %s1, %s1
            %s71 = sphi [#allocation7], [#allocation7]
          $region51: #{contrastive_loss.1} parent=47 // loop_header_branch
            %68 = sbr.rel (%p66) target = $region55
          $region52: #{contrastive_loss.1} parent=47 // loop_body
            %v72 = vld [vmem:[%s70] sm:%s63]
            %73 = vst [vmem:[%s71] sm:%s63] %v72
          $region53: #{contrastive_loss.1} parent=47 // loop_footer
            %s69 = sadd.s32 1, %s65
          $region54: #{contrastive_loss.1} parent=47 // loop_footer_branch
            %64 = sbr.rel target = $region50
          $region55: #{contrastive_loss.1} parent=47 // loop_exit
            _
        $region48: #{contrastive_loss.1} parent=6 // pred_fallthru
          _
        // Predicated region
        $region71: #{contrastive_loss.1} parent=6 // pred_check
          _
        $region72: #{contrastive_loss.1} parent=6 // pred_check_branch
          %95 = sbr.rel (0) target = $region74
        $region73: #{contrastive_loss.1} parent=6 // pred_region
          %96 = vsyncadd %s54, 128
        $region74: #{contrastive_loss.1} parent=6 // pred_fallthru
          _
        %s97 = smul.u32 8, 1
        %s98 = sshll.u32 %s97, 4
        %99 = dma.done [#allocation8], %s98
        %v100 = vld [vmem:[#allocation6] sm:$0xff]
        %v101 = vmul.f32 %v100, %v100
        %102 = vadd.xlane.f32.xlu0 %v101
        %v103 = vpop.xlane.xlu0 %102
        %v104 = vmax.f32 %v103, 1e-24
        %v105 = vrsqrt.pop %v104
        %v106 = vmul.f32 %v105, 20.0
        %v107 = vmul.f32 %v100, %v106
        %108 = vst [vmem:[#allocation2] sm:$0xff] %v107
        %s109 = sshll.u32 %s97, 4
        %110 = dma.done %s54, %s109
        %v111 = vld [vmem:[#allocation7] sm:$0xff]
        %v112 = vmul.f32 %v111, %v111
        %113 = vadd.xlane.f32.xlu0 %v112
        %v114 = vpop.xlane.xlu0 %113
        %v115 = vmax.f32 %v114, 1e-24
        %v116 = vrsqrt.pop %v115
        %v117 = vmul.f32 %v111, %v116
        %118 = vst [vmem:[#allocation3] sm:$0xff] %v117
      %vm119 = vcmask 0
      %120 = vst.msk [vmem:[#allocation4] sm:$0x1] %vm119, 0.0
    $region5: #{contrastive_loss.1} parent=1 // pred_fallthru
      _
    %s121 = sadd.s32 0, 0
    %s122 = smul.u32 %s121, 8
    %s123 = scalar_lea.vmem [#allocation2], %s122
    %v124 = vld [vmem:[%s123] sm:$0xff]
    %s125 = scalar_lea.vmem [#allocation3], %s122
    %v126 = vld [vmem:[%s125] sm:$0xff]
    %v127 = vmul.f32 %v124, %v126
    %128 = vadd.xlane.f32.xlu0 %v127
    %v129 = vpop.xlane.xlu0 %128
    %v130 = vld [vmem:[#allocation3] sm:$0xff]
    %131 = vmatprep.subr.mxu0 0.0
    %132 = vmatpush1.xpose.msra.mxu0 %v130
    %133 = vmatprep.subr.mxu0 0.0
    %134 = vmatpush1.xpose.msra.mxu0 0.0
    %135 = vmatprep.subr.mxu0 0.0
    %136 = vmatpush1.xpose.msra.mxu0 0.0
    %137 = vmatprep.subr.mxu0 0.0
    %138 = vmatpush1.xpose.msra.mxu0 0.0
    %139 = vmatprep.subr.mxu0 0.0
    %140 = vmatpush1.xpose.msra.mxu0 0.0
    %141 = vmatprep.subr.mxu0 0.0
    %142 = vmatpush1.xpose.msra.mxu0 0.0
    %143 = vmatprep.subr.mxu0 0.0
    %144 = vmatpush1.xpose.msra.mxu0 0.0
    %145 = vmatprep.subr.mxu0 0.0
    %146 = vmatpush1.xpose.msra.mxu0 0.0
    %147 = vmatprep.subr.mxu0 0.0
    %148 = vmatpush1.xpose.msra.mxu0 0.0
    %149 = vmatprep.subr.mxu0 0.0
    %150 = vmatpush1.xpose.msra.mxu0 0.0
    %151 = vmatprep.subr.mxu0 0.0
    %152 = vmatpush1.xpose.msra.mxu0 0.0
    %153 = vmatprep.subr.mxu0 0.0
    %154 = vmatpush1.xpose.msra.mxu0 0.0
    %155 = vmatprep.subr.mxu0 0.0
    %156 = vmatpush1.xpose.msra.mxu0 0.0
    %157 = vmatprep.subr.mxu0 0.0
    %158 = vmatpush1.xpose.msra.mxu0 0.0
    %159 = vmatprep.subr.mxu0 0.0
    %160 = vmatpush1.xpose.msra.mxu0 0.0
    %161 = vmatprep.subr.mxu0 0.0
    %162 = vmatpush1.xpose.msra.mxu0 0.0
    %163 = vmatprep.subr.mxu0 0.0
    %164 = vmatpush1.xpose.msra.mxu0 0.0
    %165 = vmatprep.subr.mxu0 0.0
    %166 = vmatpush1.xpose.msra.mxu0 0.0
    %167 = vmatprep.subr.mxu0 0.0
    %168 = vmatpush1.xpose.msra.mxu0 0.0
    %169 = vmatprep.subr.mxu0 0.0
    %170 = vmatpush1.xpose.msra.mxu0 0.0
    %171 = vmatprep.subr.mxu0 0.0
    %172 = vmatpush1.xpose.msra.mxu0 0.0
    %173 = vmatprep.subr.mxu0 0.0
    %174 = vmatpush1.xpose.msra.mxu0 0.0
    %175 = vmatprep.subr.mxu0 0.0
    %176 = vmatpush1.xpose.msra.mxu0 0.0
    %177 = vmatprep.subr.mxu0 0.0
    %178 = vmatpush1.xpose.msra.mxu0 0.0
    %179 = vmatprep.subr.mxu0 0.0
    %180 = vmatpush1.xpose.msra.mxu0 0.0
    %181 = vmatprep.subr.mxu0 0.0
    %182 = vmatpush1.xpose.msra.mxu0 0.0
    %183 = vmatprep.subr.mxu0 0.0
    %184 = vmatpush1.xpose.msra.mxu0 0.0
    %185 = vmatprep.subr.mxu0 0.0
    %186 = vmatpush1.xpose.msra.mxu0 0.0
    %187 = vmatprep.subr.mxu0 0.0
    %188 = vmatpush1.xpose.msra.mxu0 0.0
    %189 = vmatprep.subr.mxu0 0.0
    %190 = vmatpush1.xpose.msra.mxu0 0.0
    %191 = vmatprep.subr.mxu0 0.0
    %192 = vmatpush1.xpose.msra.mxu0 0.0
    %193 = vmatprep.subr.mxu0 0.0
    %194 = vmatpush1.xpose.msra.mxu0 0.0
    %195 = vmatprep.mubr.f32.mxu0 0.0
    %196 = vmatmul.mubr.f32.gmra.mrb[0].mxu0 %v124
    %v197 = vpop.f32.mrb[0].mxu0
    %v198 = vadd.f32 0.0, %v197
    %v199 = vpop.f32.mrb[0].mxu0
    %200 = vdwg.mxu0
    %v201 = vld [vmem:[#allocation2] sm:$0xff]
    %202 = vmatprep.subr.mxu0 0.0
    %203 = vmatpush1.xpose.msra.mxu0 %v201
    %204 = vmatprep.subr.mxu0 0.0
    %205 = vmatpush1.xpose.msra.mxu0 0.0
    %206 = vmatprep.subr.mxu0 0.0
    %207 = vmatpush1.xpose.msra.mxu0 0.0
    %208 = vmatprep.subr.mxu0 0.0
    %209 = vmatpush1.xpose.msra.mxu0 0.0
    %210 = vmatprep.subr.mxu0 0.0
    %211 = vmatpush1.xpose.msra.mxu0 0.0
    %212 = vmatprep.subr.mxu0 0.0
    %213 = vmatpush1.xpose.msra.mxu0 0.0
    %214 = vmatprep.subr.mxu0 0.0
    %215 = vmatpush1.xpose.msra.mxu0 0.0
    %216 = vmatprep.subr.mxu0 0.0
    %217 = vmatpush1.xpose.msra.mxu0 0.0
    %218 = vmatprep.subr.mxu0 0.0
    %219 = vmatpush1.xpose.msra.mxu0 0.0
    %220 = vmatprep.subr.mxu0 0.0
    %221 = vmatpush1.xpose.msra.mxu0 0.0
    %222 = vmatprep.subr.mxu0 0.0
    %223 = vmatpush1.xpose.msra.mxu0 0.0
    %224 = vmatprep.subr.mxu0 0.0
    %225 = vmatpush1.xpose.msra.mxu0 0.0
    %226 = vmatprep.subr.mxu0 0.0
    %227 = vmatpush1.xpose.msra.mxu0 0.0
    %228 = vmatprep.subr.mxu0 0.0
    %229 = vmatpush1.xpose.msra.mxu0 0.0
    %230 = vmatprep.subr.mxu0 0.0
    %231 = vmatpush1.xpose.msra.mxu0 0.0
    %232 = vmatprep.subr.mxu0 0.0
    %233 = vmatpush1.xpose.msra.mxu0 0.0
    %234 = vmatprep.subr.mxu0 0.0
    %235 = vmatpush1.xpose.msra.mxu0 0.0
    %236 = vmatprep.subr.mxu0 0.0
    %237 = vmatpush1.xpose.msra.mxu0 0.0
    %238 = vmatprep.subr.mxu0 0.0
    %239 = vmatpush1.xpose.msra.mxu0 0.0
    %240 = vmatprep.subr.mxu0 0.0
    %241 = vmatpush1.xpose.msra.mxu0 0.0
    %242 = vmatprep.subr.mxu0 0.0
    %243 = vmatpush1.xpose.msra.mxu0 0.0
    %244 = vmatprep.subr.mxu0 0.0
    %245 = vmatpush1.xpose.msra.mxu0 0.0
    %246 = vmatprep.subr.mxu0 0.0
    %247 = vmatpush1.xpose.msra.mxu0 0.0
    %248 = vmatprep.subr.mxu0 0.0
    %249 = vmatpush1.xpose.msra.mxu0 0.0
    %250 = vmatprep.subr.mxu0 0.0
    %251 = vmatpush1.xpose.msra.mxu0 0.0
    %252 = vmatprep.subr.mxu0 0.0
    %253 = vmatpush1.xpose.msra.mxu0 0.0
    %254 = vmatprep.subr.mxu0 0.0
    %255 = vmatpush1.xpose.msra.mxu0 0.0
    %256 = vmatprep.subr.mxu0 0.0
    %257 = vmatpush1.xpose.msra.mxu0 0.0
    %258 = vmatprep.subr.mxu0 0.0
    %259 = vmatpush1.xpose.msra.mxu0 0.0
    %260 = vmatprep.subr.mxu0 0.0
    %261 = vmatpush1.xpose.msra.mxu0 0.0
    %262 = vmatprep.subr.mxu0 0.0
    %263 = vmatpush1.xpose.msra.mxu0 0.0
    %264 = vmatprep.subr.mxu0 0.0
    %265 = vmatpush1.xpose.msra.mxu0 0.0
    %266 = vmatprep.mubr.f32.mxu0 0.0
    %267 = vmatmul.mubr.f32.gmra.mrb[0].mxu0 %v126
    %v268 = vpop.f32.mrb[0].mxu0
    %v269 = vadd.f32 0.0, %v268
    %v270 = vpop.f32.mrb[0].mxu0
    %271 = vdwg.mxu0
    %vm272 = vcmask 64512
    %v273 = vsel %vm272, %v198, -inf
    %274 = vmax.xlane.f32.xlu0 %v273
    %v275 = vpop.xlane.xlu0 %274
    %v276 = vsub.f32 %v198, %v275
    %v277 = vmul.f32 %v276, 1.442695
    %v278 = vpow.pop %v277
    %v279 = vsel %vm272, %v278, 0.0
    %280 = vadd.xlane.f32.xlu0 %v279
    %v281 = vpop.xlane.xlu0 %280
    %v282 = vlog2.pop %v281
    %v283 = vmul.f32 %v282, 0.6931472
    %v284 = vadd.f32 %v275, %v283
    %v285 = vsel %vm272, %v269, -inf
    %286 = vmax.xlane.f32.xlu0 %v285
    %v287 = vpop.xlane.xlu0 %286
    %v288 = vsub.f32 %v269, %v287
    %v289 = vmul.f32 %v288, 1.442695
    %v290 = vpow.pop %v289
    %v291 = vsel %vm272, %v290, 0.0
    %292 = vadd.xlane.f32.xlu0 %v291
    %v293 = vpop.xlane.xlu0 %292
    %v294 = vlog2.pop %v293
    %v295 = vmul.f32 %v294, 0.6931472
    %v296 = vadd.f32 %v287, %v295
    %v297 = vld [vmem:[#allocation4] sm:$0x1]
    %v298 = vadd.f32 %v284, %v296
    %v299 = vmul.f32 %v129, 2.0
    %v300 = vsub.f32 %v298, %v299
    %vm301 = vcmask 7168
    %v302 = vsel %vm301, %v300, 0.0
    %303 = vadd.xlane.f32.xlu0 %v302
    %v304 = vpop.xlane.xlu0 %303
    %v305 = vrot.slane %v304, 4
    %v306 = vadd.f32 %v304, %v305
    %v307 = vrot.slane %v306, 2
    %v308 = vadd.f32 %v306, %v307
    %v309 = vrot.slane %v308, 1
    %v310 = vadd.f32 %v308, %v309
    %s311 = vtos %v310
    %v312 = vstv %s311
    %v313 = vadd.f32 %v297, %v312
    %vm314 = vcmask 0
    %315 = vst.msk [vmem:[#allocation4] sm:$0x1] %vm314, %v313
    // Predicated region
    $region75: #{contrastive_loss.1} parent=1 // pred_check
      %p316 = pneg %p8
    $region76: #{contrastive_loss.1} parent=1 // pred_check_branch
      %318 = sbr.rel (%p316) target = $region78
    $region77: #{contrastive_loss.1} parent=1 // pred_region
      %v319 = vld [vmem:[#allocation4] sm:$0x1]
      %v320 = vmul.f32 %v319, 0.0625
      %321 = vst.msk [vmem:[#allocation4] sm:$0x1] %vm314, %v320
    $region78: #{contrastive_loss.1} parent=1 // pred_fallthru
      _
    // Predicated region
    $region79: #{contrastive_loss.1} parent=1 // pred_check
      _
    $region80: #{contrastive_loss.1} parent=1 // pred_check_branch
      %323 = sbr.rel (0) target = $region82
    $region81: #{contrastive_loss.1} parent=1 // pred_region
      %s325 = ssub.s32 16, 16
      %326 = vsyncadd [#allocation5], %s325
      %s328 = sshll.u32 [#allocation4], 4
      %s329 = int_to_ptr.vmem [resolvable:$true] %s328
      %331 = dma.vmem_to_hbm [thread:$0]  %s329, 16, %s2, [#allocation5]
    $region82: #{contrastive_loss.1} parent=1 // pred_fallthru
      _
    // Predicated region
    $region83: #{contrastive_loss.1} parent=1 // pred_check
      _
    $region84: #{contrastive_loss.1} parent=1 // pred_check_branch
      %333 = sbr.rel (0) target = $region86
    $region85: #{contrastive_loss.1} parent=1 // pred_region
      %334 = dma.done [#allocation5], 16
    $region86: #{contrastive_loss.1} parent=1 // pred_fallthru
      _
    %335 = vsyncpa [#allocation5], 1

</llo_original>
